<compile_context>
chip_gen: v6e
topology: v6e:2x2x1
jax: 0.10.0
libtpu: 0.0.40
codegen_flags: <defaults>
</compile_context>

<pallas_src>
import jax
import jax.numpy as jnp
from jax.experimental import pallas as pl
from jax.experimental.pallas import tpu as pltpu


def _round_up(x, m):
    return (x + m - 1) // m * m


def _sublane(dtype):
    # Min second-to-last block granularity: 8 (4B), 16 (2B), 32 (1B) dtypes.
    return max(8, 32 // jnp.dtype(dtype).itemsize)


def _pick_lanes(n):
    """Largest lane width in {2048,...,128} dividing n (zero-copy fast path)."""
    for lanes in (2048, 1024, 512, 256, 128):
        if n % lanes == 0:
            return lanes, False
    return 128, True  # rare fallback: pad the flat tensor to a multiple of 128


def _block_byte_budget():
    """Per-block byte budget by TPU generation; keeps the double-buffered
    in+out footprint well under the default scoped-VMEM limit."""
    try:
        kind = jax.devices()[0].device_kind.lower()
    except Exception:  # pragma: no cover
        kind = ""
    if "v5" in kind:           # 16 MiB default scoped VMEM -> 2 MiB blocks (8 MiB total)
        return 2 * 1024 * 1024
    return 4 * 1024 * 1024     # v6e / v7x: 4 MiB blocks (16 MiB double-buffered)


def rezero_scale(x, g, fn=None):
    """Pallas TPU streaming kernel for `fn(x) * g`.

    `fn` must be elementwise (it is applied per VMEM block on a flattened
    layout); pass fn=None for the plain `x * g` rescale.
    """
    if fn is None:
        fn = lambda t: t

    orig_shape = x.shape
    n = x.size

    g_arr = jnp.asarray(g)
    y_dtype = jax.eval_shape(fn, jax.ShapeDtypeStruct(x.shape, x.dtype)).dtype
    out_dtype = jnp.result_type(y_dtype, g_arr.dtype)
    # g in SMEM as float32 (the PyTorch Parameter dtype); product is computed
    # in the promoted output dtype, matching torch promotion semantics.
    g_smem = g_arr.astype(jnp.float32).reshape(1, 1)

    lanes, needs_pad = _pick_lanes(n)
    flat = jnp.ravel(x)
    if needs_pad:
        n_pad = _round_up(n, lanes)
        flat = jnp.pad(flat, (0, n_pad - n))
    else:
        n_pad = n
    m = n_pad // lanes
    x2d = flat.reshape(m, lanes)

    in_itemsize = jnp.dtype(x.dtype).itemsize
    out_itemsize = jnp.dtype(out_dtype).itemsize
    sublane = max(_sublane(x.dtype), _sublane(out_dtype))

    # Row tile: ~2-4 MiB (of the wider dtype) per block, multiple of `sublane`,
    # and small enough that the grid has >=4 steps when m allows it.
    bytes_per_row = lanes * max(in_itemsize, out_itemsize)
    rows_cap = max(sublane,
                   (_block_byte_budget() // bytes_per_row) // sublane * sublane)
    rows_quarter = _round_up(pl.cdiv(m, 4), sublane)
    tm = min(rows_cap, rows_quarter)
    if tm >= m:
        tm = m  # single block: block dims equal the full array dims (always legal)
    grid = (pl.cdiv(m, tm),)  # ragged last block is clamped/masked by Pallas

    def kernel(g_ref, x_ref, o_ref):
        # g_ref : SMEM (1, 1) float32 scalar gate
        # x_ref : VMEM (tm, lanes) slab of x
        # o_ref : VMEM (tm, lanes) output slab
        y = fn(x_ref[...])
        o_ref[...] = y.astype(out_dtype) * g_ref[0, 0].astype(out_dtype)

    cost = pl.CostEstimate(
        flops=n_pad,
        transcendentals=0,
        bytes_accessed=n_pad * (in_itemsize + out_itemsize),
    )

    call_kwargs = {}
    if jnp.dtype(x.dtype) == jnp.dtype(out_dtype):
        # Donate the dead-after-call input slab to the output buffer.
        call_kwargs["input_output_aliases"] = {1: 0}

    out2d = pl.pallas_call(
        kernel,
        out_shape=jax.ShapeDtypeStruct((m, lanes), out_dtype),
        grid=grid,
        in_specs=[
            pl.BlockSpec(memory_space=pltpu.MemorySpace.SMEM),  # g (1, 1)
            pl.BlockSpec((tm, lanes), lambda i: (i, 0)),        # x slab
        ],
        out_specs=pl.BlockSpec((tm, lanes), lambda i: (i, 0)),
        compiler_params=pltpu.CompilerParams(
            dimension_semantics=("parallel",),
        ),
        cost_estimate=cost,
        **call_kwargs,
    )(g_smem, x2d)

    out_flat = out2d.reshape(-1)
    if needs_pad:
        out_flat = out_flat[:n]
    return out_flat.reshape(orig_shape)


def rezero(x, g, fn=lambda t: t, fn_is_elementwise=False):
    """Rezero forward: fn(x) * g.

    If `fn` is declared elementwise it is fused into the Pallas kernel
    (saves one full HBM read+write of the tensor); otherwise it is applied
    as a plain JAX callable and only the `* g` rescale runs in Pallas.
    """
    if fn_is_elementwise:
        return rezero_scale(x, g, fn=fn)
    # TODO(synk): arbitrary (non-elementwise) wrapped `self.fn` sub-modules
    # cannot be fused into the Pallas kernel; they run as plain JAX here.
    return rezero_scale(fn(x), g, fn=None)


if __name__ == "__main__":
    B, C, H, W = 2, 4, 16, 16
    key = jax.random.PRNGKey(0)
    k_x, k_g = jax.random.split(key, 2)

    x = jax.random.normal(k_x, (B, C, H, W), dtype=jnp.float32)
    # nn.Parameter(torch.zeros(1)) -- zeros matches __init__, but use a
    # deterministic nonzero value so the compute path is exercised.
    g = 0.1 + 0.05 * jax.random.normal(k_g, (1,), dtype=jnp.float32)

    fn = jax.nn.gelu  # example wrapped elementwise sub-module

    # Fused path (fn inside the kernel).
    out = jax.block_until_ready(rezero(x, g, fn=fn, fn_is_elementwise=True))
    ref = fn(x) * g
    assert out.shape == (B, C, H, W)
    assert out.dtype == ref.dtype
    assert jnp.allclose(out, ref, atol=1e-5, rtol=1e-5), "fused mismatch vs reference"

    # Unfused path (arbitrary fn applied outside, Pallas does only * g).
    out_unfused = jax.block_until_ready(rezero(x, g, fn=fn, fn_is_elementwise=False))
    assert jnp.allclose(out_unfused, ref, atol=1e-5, rtol=1e-5), "unfused mismatch"

    # g == 0 init case from the module definition.
    out0 = jax.block_until_ready(
        rezero(x, jnp.zeros((1,), jnp.float32), fn=fn, fn_is_elementwise=True))
    assert jnp.allclose(out0, jnp.zeros_like(x)), "g=0 init mismatch"

    # Odd-sized tensor: exercises the lane-pad fallback + ragged last block.
    x_odd = jax.random.normal(k_x, (3, 5, 7, 11), dtype=jnp.float32)  # n = 1155
    out_odd = jax.block_until_ready(rezero(x_odd, g, fn=fn, fn_is_elementwise=True))
    assert jnp.allclose(out_odd, fn(x_odd) * g, atol=1e-5, rtol=1e-5), "ragged mismatch"

    print("KERNEL_OK")
</pallas_src>

<mosaic_0001>
module attributes {stable_mosaic.version = 11 : i64} {
  func.func @kernel(%arg0: i32, %arg1: memref<1x1xf32, #tpu.memory_space<smem>>, %arg2: memref<1x2048xf32, #tpu.memory_space<vmem>>, %arg3: memref<1x2048xf32, #tpu.memory_space<vmem>>) attributes {dimension_semantics = [#tpu.dimension_semantics<parallel>], iteration_bounds = array<i64: 1>, scalar_prefetch = 0 : i64, scratch_operands = 0 : i64, tpu.core_type = #tpu.core_type<tc>, window_params = [{transform_indices = @transform_0, window_bounds = array<i64: 1, 1>}, {transform_indices = @transform_1, window_bounds = array<i64: 1, 2048>}, {transform_indices = @transform_2, window_bounds = array<i64: 1, 2048>}]} {
    %c0 = arith.constant 0 : index
    %c0_0 = arith.constant 0 : index
    %0 = vector.load %arg2[%c0, %c0_0] : memref<1x2048xf32, #tpu.memory_space<vmem>>, vector<1x2048xf32>
    %1 = arith.mulf %0, %0 : vector<1x2048xf32>
    %2 = arith.mulf %0, %1 : vector<1x2048xf32>
    %cst = arith.constant 4.471500e-02 : f32
    %3 = vector.broadcast %cst : f32 to vector<1x2048xf32>
    %4 = arith.mulf %3, %2 : vector<1x2048xf32>
    %5 = arith.addf %0, %4 : vector<1x2048xf32>
    %cst_1 = arith.constant 0.797884583 : f32
    %6 = vector.broadcast %cst_1 : f32 to vector<1x2048xf32>
    %7 = arith.mulf %6, %5 : vector<1x2048xf32>
    %8 = math.tanh %7 : vector<1x2048xf32>
    %cst_2 = arith.constant 1.000000e+00 : f32
    %9 = vector.broadcast %cst_2 : f32 to vector<1x2048xf32>
    %10 = arith.addf %9, %8 : vector<1x2048xf32>
    %cst_3 = arith.constant 5.000000e-01 : f32
    %11 = vector.broadcast %cst_3 : f32 to vector<1x2048xf32>
    %12 = arith.mulf %11, %10 : vector<1x2048xf32>
    %13 = arith.mulf %0, %12 : vector<1x2048xf32>
    %c0_4 = arith.constant 0 : index
    %c0_5 = arith.constant 0 : index
    %14 = memref.load %arg1[%c0_4, %c0_5] : memref<1x1xf32, #tpu.memory_space<smem>>
    %15 = vector.broadcast %14 : f32 to vector<1x2048xf32>
    %16 = arith.mulf %13, %15 : vector<1x2048xf32>
    %c0_6 = arith.constant 0 : index
    %c0_7 = arith.constant 0 : index
    %17 = vector.load %arg3[%c0_6, %c0_7] : memref<1x2048xf32, #tpu.memory_space<vmem>>, vector<1x2048xf32>
    tpu.vector_store %arg3[%c0_6, %c0_7], %16 {strides = array<i32>} : memref<1x2048xf32, #tpu.memory_space<vmem>>, vector<1x2048xf32>,
    return
  }
  func.func @transform_0(%arg0: i32) -> (i32, i32) {
    %c0_i32 = arith.constant 0 : i32
    %c0_i32_0 = arith.constant 0 : i32
    %c0_i32_1 = arith.constant 0 : i32
    return %c0_i32, %c0_i32_0 : i32, i32
  }
  func.func @transform_1(%arg0: i32) -> (i32, i32) {
    %c0_i32 = arith.constant 0 : i32
    %c0_i32_0 = arith.constant 0 : i32
    return %arg0, %c0_i32 : i32, i32
  }
  func.func @transform_2(%arg0: i32) -> (i32, i32) {
    %c0_i32 = arith.constant 0 : i32
    %c0_i32_0 = arith.constant 0 : i32
    return %arg0, %c0_i32 : i32, i32
  }
}

</mosaic_0001>

<llo_original>
// kernel: tpu_custom_call.1
$region0: #{tpu_custom_call.1}
  #allocation0 [shape = 'u32[]', space=smem, size = 0x4, offset = 0x4, fixed_abs, tag = 'smem constant byte address 0x4 - core index']
  #allocation1 [shape = 'u32[144,128]{1,0:T(1,128)}', space=vmem, size = 0x12000, scoped, tag = 'internal scratch']
  #allocation2 [shape = 'f32[1,1]{1,0:T(1,128)S(6)}', space=smem, size = 0x200, scoped, tag = 'scoped memory for tpu_custom_call.1']
  %s0 = inlined_call_operand.<no memory space> [shape: f32[1,1], index: 0, kind: input, shape index: {}]
  %s1 = inlined_call_operand.hbm [shape: f32[1,2048], index: 1, kind: input, shape index: {}, may-alias: {1,2}]
  %s2 = inlined_call_operand.hbm [shape: f32[1,2048], index: 2, kind: output, shape index: {}, may-alias: {1,2}]
  %s3 = sld [smem:[#allocation0]]
  $region22: #{tpu_custom_call.1} parent=0
    _
  %s5 = ssub.s32 1, %s3
  %s6 = scalar_select 0, %s5, %s3
  %7 = sst [smem:[#allocation2]] %s0
  $region1: #{tpu_custom_call.1} parent=0
    #allocation3 [shape = 'u8[8192]{0}', space=vmem, size = 0x2000, scoped, tag = 'input window, operand 1, single buffered']
    #allocation4 [shape = 's32[1]{0}', space=sflag, size = 0x4, scoped, tag = 'scoped memory for tpu_custom_call.1']
    #allocation5 [shape = 's32[1]{0}', space=sflag, size = 0x4, scoped, tag = 'scoped memory for tpu_custom_call.1']
    #allocation6 [shape = 'u8[8192]{0}', space=vmem, size = 0x2000, scoped, tag = 'output window, operand 0, single buffered']
    %8 = vsyncpa [#allocation4], 0
    %9 = vsyncpa [#allocation5], 0
    // Predicated region
    $region2: #{tpu_custom_call.1} parent=1 // pred_check
      _
    $region3: #{tpu_custom_call.1} parent=1 // pred_check_branch
      %11 = sbr.rel (0) target = $region5
    $region4: #{tpu_custom_call.1} parent=1 // pred_region
      _
    $region5: #{tpu_custom_call.1} parent=1 // pred_fallthru
      _
    // Predicated region
    $region6: #{tpu_custom_call.1} parent=1 // pred_check
      _
    $region7: #{tpu_custom_call.1} parent=1 // pred_check_branch
      %13 = sbr.rel (0) target = $region9
    $region8: #{tpu_custom_call.1} parent=1 // pred_region
      %s15 = ssub.s32 256, 256
      %16 = vsyncadd [#allocation4], %s15
      %s18 = sshll.u32 [#allocation3], 4
      %s19 = int_to_ptr.vmem [resolvable:$true] %s18
      %21 = dma.hbm_to_vmem [thread:$0]  %s1, 256, %s19, [#allocation4]
    $region9: #{tpu_custom_call.1} parent=1 // pred_fallthru
      _
    // Predicated region
    $region10: #{tpu_custom_call.1} parent=1 // pred_check
      _
    $region11: #{tpu_custom_call.1} parent=1 // pred_check_branch
      %23 = sbr.rel (0) target = $region13
    $region12: #{tpu_custom_call.1} parent=1 // pred_region
      %24 = dma.done [#allocation4], 256
    $region13: #{tpu_custom_call.1} parent=1 // pred_fallthru
      _
    %v25 = vld [vmem:[#allocation3] sm:$0xff]
    %v26 = vld [vmem:[#allocation3 + $0x8] sm:$0xff]
    %v27 = vmul.f32 %v25, %v25
    %v28 = vmul.f32 %v26, %v26
    %v29 = vmul.f32 %v25, %v27
    %v30 = vmul.f32 %v26, %v28
    %v31 = vmul.f32 %v29, 0.044715
    %v32 = vmul.f32 %v30, 0.044715
    %v33 = vadd.f32 %v25, %v31
    %v34 = vadd.f32 %v26, %v32
    %v35 = vmul.f32 %v33, 0.7978846
    %v36 = vmul.f32 %v34, 0.7978846
    %v37 = vtanh.pop %v35
    %v38 = vtanh.pop %v36
    %v39 = vadd.f32 %v37, 1.0
    %v40 = vadd.f32 %v38, 1.0
    %v41 = vmul.f32 %v39, 0.5
    %v42 = vmul.f32 %v40, 0.5
    %v43 = vmul.f32 %v25, %v41
    %v44 = vmul.f32 %v26, %v42
    %s45 = sld [smem:[#allocation2]]
    %v46 = vstv %s45
    %v47 = vmul.f32 %v43, %v46
    %v48 = vmul.f32 %v44, %v46
    %49 = vst [vmem:[#allocation6] sm:$0xff] %v47
    %50 = vst [vmem:[#allocation6 + $0x8] sm:$0xff] %v48
    // Predicated region
    $region14: #{tpu_custom_call.1} parent=1 // pred_check
      _
    $region15: #{tpu_custom_call.1} parent=1 // pred_check_branch
      %52 = sbr.rel (0) target = $region17
    $region16: #{tpu_custom_call.1} parent=1 // pred_region
      %s54 = ssub.s32 256, 256
      %55 = vsyncadd [#allocation5], %s54
      %s57 = sshll.u32 [#allocation6], 4
      %s58 = int_to_ptr.vmem [resolvable:$true] %s57
      %60 = dma.vmem_to_hbm [thread:$0]  %s58, 256, %s2, [#allocation5]
    $region17: #{tpu_custom_call.1} parent=1 // pred_fallthru
      _
    // Predicated region
    $region18: #{tpu_custom_call.1} parent=1 // pred_check
      _
    $region19: #{tpu_custom_call.1} parent=1 // pred_check_branch
      %62 = sbr.rel (0) target = $region21
    $region20: #{tpu_custom_call.1} parent=1 // pred_region
      %63 = dma.done [#allocation5], 256
    $region21: #{tpu_custom_call.1} parent=1 // pred_fallthru
      _
    %64 = vsyncpa [#allocation4], 1
    %65 = vsyncpa [#allocation5], 1

</llo_original>
